<compile_context>
chip_gen: v6e
topology: v6e:2x2x1
jax: 0.10.0
libtpu: 0.0.40
codegen_flags: <defaults>
</compile_context>

<pallas_src>
import jax
import jax.numpy as jnp
from jax.experimental import pallas as pl
from jax.experimental.pallas import tpu as pltpu


# ----------------------------------------------------------------------------
# True Identity: the optimal implementation is no kernel at all.
# ----------------------------------------------------------------------------
def identity(x):
    """nn.Identity().forward(x): pure pass-through, no data movement."""
    return x


# ----------------------------------------------------------------------------
# Mandated-copy path: direct HBM->HBM DMA (no VMEM staging).
# ----------------------------------------------------------------------------
_CHUNK_MIN_BYTES = 8 * 1024 * 1024   # only split copies >= 8 MiB
_MAX_DMA_CHUNKS = 4                  # concurrent DMA streams for large copies


def _make_hbm_copy_kernel(chunk_bounds):
    """Build a kernel issuing one HBM->HBM DMA per static leading-dim chunk."""
    n_chunks = len(chunk_bounds)

    def kernel(x_hbm, o_hbm, sems):
        if n_chunks == 1:
            copies = [pltpu.make_async_copy(x_hbm, o_hbm, sems.at[0])]
        else:
            copies = [
                pltpu.make_async_copy(
                    x_hbm.at[pl.ds(off, sz)],
                    o_hbm.at[pl.ds(off, sz)],
                    sems.at[i],
                )
                for i, (off, sz) in enumerate(chunk_bounds)
            ]
        # Issue all DMAs first (they run concurrently), then wait on all.
        for cp in copies:
            cp.start()
        for cp in copies:
            cp.wait()

    return kernel


def identity_copy(x: jax.Array) -> jax.Array:
    """Materialize a bit-exact copy of `x` with a Pallas HBM->HBM DMA kernel."""
    x = jnp.asarray(x)
    if x.size == 0:
        return x

    orig_shape = x.shape
    xv = x.reshape(1) if x.ndim == 0 else x   # DMA wants at least rank 1

    itemsize = jnp.dtype(xv.dtype).itemsize
    nbytes = int(xv.size) * itemsize
    dim0 = int(xv.shape[0])

    # Static leading-dim chunking (trace-time Python): a few concurrent DMA
    # streams for big copies, a single full-array DMA otherwise.
    if nbytes >= _CHUNK_MIN_BYTES and dim0 >= 2:
        n_chunks = min(_MAX_DMA_CHUNKS, dim0)
        base, rem = divmod(dim0, n_chunks)
        bounds, off = [], 0
        for i in range(n_chunks):
            sz = base + (1 if i < rem else 0)
            bounds.append((off, sz))
            off += sz
    else:
        bounds = [(0, dim0)]

    out = pl.pallas_call(
        _make_hbm_copy_kernel(tuple(bounds)),
        out_shape=jax.ShapeDtypeStruct(xv.shape, xv.dtype),
        in_specs=[pl.BlockSpec(memory_space=pl.ANY)],    # stay in HBM
        out_specs=pl.BlockSpec(memory_space=pl.ANY),     # stay in HBM
        scratch_shapes=[pltpu.SemaphoreType.DMA((len(bounds),))],
        compiler_params=pltpu.CompilerParams(has_side_effects=True),
        cost_estimate=pl.CostEstimate(
            flops=0,
            transcendentals=0,
            bytes_accessed=2 * nbytes,                   # pure mem-bound copy
        ),
    )(xv)

    return out.reshape(orig_shape)


if __name__ == "__main__":
    key = jax.random.PRNGKey(0)

    # Small NCHW-style input consistent with typical usage of the module.
    x = jax.random.normal(key, (2, 4, 16, 16), dtype=jnp.float32)

    # 1) True Identity semantics: zero-cost pass-through.
    y = jax.block_until_ready(identity(x))
    assert y.shape == x.shape and y.dtype == x.dtype
    assert jnp.array_equal(y, x), "identity pass-through mismatch"

    # 2) Pallas kernel path (mandated copy): HBM->HBM DMA, run once and block.
    yc = jax.block_until_ready(identity_copy(x))
    assert yc.shape == x.shape and yc.dtype == x.dtype
    assert jnp.array_equal(yc, x), "identity copy mismatch"

    # Extra coverage through the copy kernel: bf16, non-128-divisible shape,
    # and a ~16 MiB array that exercises the multi-DMA chunked path.
    for xt in (
        jax.random.normal(key, (2, 8, 32), dtype=jnp.bfloat16),
        jax.random.normal(key, (3, 7), dtype=jnp.float32),
        jax.random.normal(key, (1024, 4096), dtype=jnp.float32),
    ):
        yt = jax.block_until_ready(identity_copy(xt))
        assert yt.shape == xt.shape and yt.dtype == xt.dtype
        assert jnp.array_equal(yt, xt), "identity copy mismatch (extra case)"

    # Rank-0 input: handled without launching any kernel.
    s = jnp.float32(3.5)
    assert jnp.array_equal(identity(s), s)
    assert jnp.array_equal(jax.block_until_ready(identity_copy(s)), s)

    print("KERNEL_OK")
</pallas_src>

<mosaic_0001>
module attributes {stable_mosaic.version = 11 : i64} {
  func.func @kernel(%arg0: memref<2x4x16x16xf32, #tpu.memory_space<any>>, %arg1: memref<2x4x16x16xf32, #tpu.memory_space<any>>, %arg2: memref<1x!tpu.dma_semaphore, #tpu.memory_space<semaphore_mem>>) attributes {dimension_semantics = [], scalar_prefetch = 0 : i64, scratch_operands = 1 : i64, tpu.core_type = #tpu.core_type<tc>} {
    %c0_i32 = arith.constant 0 : i32
    %0 = tpu.memref_slice %arg2[%c0_i32] : memref<1x!tpu.dma_semaphore, #tpu.memory_space<semaphore_mem>> -> memref<1x!tpu.dma_semaphore, #tpu.memory_space<semaphore_mem>>
    %1 = tpu.memref_squeeze %0 : memref<1x!tpu.dma_semaphore, #tpu.memory_space<semaphore_mem>> -> memref<!tpu.dma_semaphore, #tpu.memory_space<semaphore_mem>>
    tpu.enqueue_dma source(%arg0 : memref<2x4x16x16xf32, #tpu.memory_space<any>>) target(%arg1 : memref<2x4x16x16xf32, #tpu.memory_space<any>>) target_semaphore(%1 : memref<!tpu.dma_semaphore, #tpu.memory_space<semaphore_mem>>)
    %c0_i32_0 = arith.constant 0 : i32
    %2 = tpu.memref_slice %arg2[%c0_i32_0] : memref<1x!tpu.dma_semaphore, #tpu.memory_space<semaphore_mem>> -> memref<1x!tpu.dma_semaphore, #tpu.memory_space<semaphore_mem>>
    %3 = tpu.memref_squeeze %2 : memref<1x!tpu.dma_semaphore, #tpu.memory_space<semaphore_mem>> -> memref<!tpu.dma_semaphore, #tpu.memory_space<semaphore_mem>>
    tpu.wait_dma2 semaphore(%3 : memref<!tpu.dma_semaphore, #tpu.memory_space<semaphore_mem>>) src(%arg0 : memref<2x4x16x16xf32, #tpu.memory_space<any>>) dst(%arg1 : memref<2x4x16x16xf32, #tpu.memory_space<any>>)
    return
  }
}

</mosaic_0001>

<llo_original>
// kernel: tpu_custom_call.1
$region0: #{tpu_custom_call.1}
  #allocation0 [shape = 'u32[]', space=smem, size = 0x4, offset = 0x4, fixed_abs, tag = 'smem constant byte address 0x4 - core index']
  #allocation1 [shape = 'u32[144,128]{1,0:T(1,128)}', space=vmem, size = 0x12000, scoped, tag = 'internal scratch']
  #allocation2 [shape = 's32[1]{0}', space=sflag, size = 0x4, scoped, tag = 'scratch operand']
  #allocation3 [shape = 's32[]', space=sflag, size = 0x4, offset = 0, fixed_abs, tag = 'sflag constant byte address 0x0 - dummy sync flag']
  #allocation4 [shape = 'u32[0]{0}', space=smem, size = 0, offset = 0, fixed_abs, tag = 'smem constant byte address 0x0 - null']
  %s0 = inlined_call_operand.hbm [shape: f32[2,4,16,16], index: 0, kind: input, shape index: {}]
  %s1 = inlined_call_operand.hbm [shape: f32[2,4,16,16], index: 1, kind: output, shape index: {}]
  %s2 = sld [smem:[#allocation0]]
  $region2: #{tpu_custom_call.1} parent=0
    _
  %s4 = ssub.s32 1, %s2
  %s5 = scalar_select 0, %s4, %s2
  %s7 = sshll.u32 1, 14
  %s8 = sxor.u32 4294967295, %s7
  %12 = dma.general %s0, 2048, %s1, [#allocation2], 131072, [#allocation4], 0, 0
  %s13 = smul.u32 2, 4
  %s14 = smul.u32 %s13, 16
  %s15 = smul.u32 %s14, 1
  %s16 = sshll.u32 %s15, 4
  %17 = dma.done [#allocation2], %s16
  %18 = vsyncmov [#allocation2]
  %s19 = vpop.sfrf %18
  %p20 = scmp.eq.s32.totalorder %s19, 0
  %p21 = pneg %p20
  %23 = shalt.err (%p21)

</llo_original>
